<compile_context>
chip_gen: v7x
topology: tpu7x:2x2x1
jax: 0.10.0
libtpu: 0.0.40
codegen_flags: <defaults>
</compile_context>

<pallas_src>
import functools

import jax
import jax.numpy as jnp
from jax.experimental import pallas as pl
from jax.experimental.pallas import tpu as pltpu

LANE = 128


def _round_up(v, m):
    return ((v + m - 1) // m) * m


def _pad2(a, rows, cols):
    """Zero-pad a 2-D array up to (rows, cols)."""
    return jnp.pad(a, ((0, rows - a.shape[0]), (0, cols - a.shape[1])))


def ga_mlp_kernel(x_ref, w1_ref, b1_ref, w2_ref, b2_ref,
                  rw0_ref, rb0_ref, rw1_ref, rb1_ref, rw2_ref, rb2_ref,
                  out_ref, acc_ref, *, inv_n):
    """Grid = (graph b [parallel], node-tile k [arbitrary/reduction])."""
    k = pl.program_id(1)

    @pl.when(k == 0)
    def _init():
        acc_ref[...] = jnp.zeros_like(acc_ref)

    # feat_mlp on this tile of nodes (Dropout = identity in eval mode).
    x = x_ref[...]                                                       # (TN, F)
    h = jnp.dot(x, w1_ref[...], preferred_element_type=jnp.float32) + b1_ref[...]
    h = jnp.maximum(h, 0.0)
    h = jnp.dot(h, w2_ref[...], preferred_element_type=jnp.float32) + b2_ref[...]
    h = jnp.maximum(h, 0.0)                                              # (TN, Hp)

    # global_mean_pool: accumulate per-graph node-sum in VMEM scratch (XLU reduce).
    acc_ref[...] += jnp.sum(h, axis=0, keepdims=True)                    # (1, Hp)

    @pl.when(k == pl.num_programs(1) - 1)
    def _finalize():
        pooled = acc_ref[...] * inv_n                                    # mean over N nodes
        # MLPReadout: H -> H/2 -> H/4 -> C (ReLU on first two layers) -- runs once/graph.
        y = jnp.dot(pooled, rw0_ref[...], preferred_element_type=jnp.float32) + rb0_ref[...]
        y = jnp.maximum(y, 0.0)
        y = jnp.dot(y, rw1_ref[...], preferred_element_type=jnp.float32) + rb1_ref[...]
        y = jnp.maximum(y, 0.0)
        y = jnp.dot(y, rw2_ref[...], preferred_element_type=jnp.float32) + rb2_ref[...]
        out_ref[...] = y                                                 # (1, Cp)


def ga_mlp_forward(x, params, *, node_tile=None):
    """x: (B, N, F) float32; params: dict of (in,out) weights (PyTorch W.T) and (1,out) biases."""
    B, N, F = x.shape
    H = params["w1"].shape[1]
    H2 = params["rw0"].shape[1]
    H4 = params["rw1"].shape[1]
    C = params["rw2"].shape[1]

    # Lane-dense padded widths (exact: padded weights/biases are zero, ReLU(0)=0).
    Hp = _round_up(H, LANE)
    H2p = _round_up(H2, LANE)
    H4p = _round_up(H4, LANE)
    Cp = _round_up(C, LANE)

    # Node-tile size: multiple of 8 dividing N (or the full node axis).
    if node_tile is None:
        node_tile = min(N, 512)
    if N % 8 == 0:
        node_tile = min(node_tile, N)
        node_tile = max(8, node_tile - (node_tile % 8))
        while N % node_tile != 0:
            node_tile -= 8
    else:
        node_tile = N
    assert N % node_tile == 0

    w1 = _pad2(params["w1"], F, Hp)
    b1 = _pad2(params["b1"], 1, Hp)
    w2 = _pad2(params["w2"], Hp, Hp)
    b2 = _pad2(params["b2"], 1, Hp)
    rw0 = _pad2(params["rw0"], Hp, H2p)
    rb0 = _pad2(params["rb0"], 1, H2p)
    rw1 = _pad2(params["rw1"], H2p, H4p)
    rb1 = _pad2(params["rb1"], 1, H4p)
    rw2 = _pad2(params["rw2"], H4p, Cp)
    rb2 = _pad2(params["rb2"], 1, Cp)

    x = x.astype(jnp.float32)
    weights = (w1, b1, w2, b2, rw0, rb0, rw1, rb1, rw2, rb2)

    grid = (B, N // node_tile)

    x_spec = pl.BlockSpec((None, node_tile, F), lambda b, k: (b, k, 0))
    w_specs = [pl.BlockSpec(w.shape, lambda b, k: (0, 0)) for w in weights]
    out_spec = pl.BlockSpec((None, 1, Cp), lambda b, k: (b, 0, 0))

    flops = 2 * B * N * (F * Hp + Hp * Hp) + 2 * B * (Hp * H2p + H2p * H4p + H4p * Cp)
    bytes_accessed = x.size * 4 + sum(int(w.size) * 4 for w in weights) + B * Cp * 4

    kernel = functools.partial(ga_mlp_kernel, inv_n=1.0 / float(N))

    out = pl.pallas_call(
        kernel,
        out_shape=jax.ShapeDtypeStruct((B, 1, Cp), jnp.float32),
        grid_spec=pltpu.PrefetchScalarGridSpec(
            num_scalar_prefetch=0,
            grid=grid,
            in_specs=[x_spec] + w_specs,
            out_specs=out_spec,
            scratch_shapes=[pltpu.VMEM((1, Hp), jnp.float32)],  # per-graph pooled-sum acc
        ),
        compiler_params=pltpu.CompilerParams(
            dimension_semantics=("parallel", "arbitrary"),
            vmem_limit_bytes=32 * 1024 * 1024,  # safe on v5e/v6e/v7x; tiles here are tiny
        ),
        cost_estimate=pl.CostEstimate(
            flops=int(flops), transcendentals=0, bytes_accessed=int(bytes_accessed)),
    )(x, *weights)

    return out[:, 0, :C]   # drop the padded lanes / singleton dim -> (B, C) logits


# -------------------- parameter init & pure-JAX reference --------------------

def xavier_uniform(key, in_dim, out_dim):
    bound = (6.0 / (in_dim + out_dim)) ** 0.5
    # stored as (in_dim, out_dim) = PyTorch weight.T
    return jax.random.uniform(key, (in_dim, out_dim), jnp.float32, -bound, bound)


def init_params(key, F, H, C):
    ks = jax.random.split(key, 5)
    return {
        # feat_mlp (Xavier uniform weights, zero biases, as in initialise_embeddings)
        "w1": xavier_uniform(ks[0], F, H), "b1": jnp.zeros((1, H), jnp.float32),
        "w2": xavier_uniform(ks[1], H, H), "b2": jnp.zeros((1, H), jnp.float32),
        # MLPReadout: H -> H//2 -> H//4 -> C
        "rw0": xavier_uniform(ks[2], H, H // 2), "rb0": jnp.zeros((1, H // 2), jnp.float32),
        "rw1": xavier_uniform(ks[3], H // 2, H // 4), "rb1": jnp.zeros((1, H // 4), jnp.float32),
        "rw2": xavier_uniform(ks[4], H // 4, C), "rb2": jnp.zeros((1, C), jnp.float32),
    }


def reference_forward(x, params):
    """Pure-JAX reference mirroring the PyTorch forward (eval mode)."""
    h = jnp.maximum(x @ params["w1"] + params["b1"], 0.0)
    h = jnp.maximum(h @ params["w2"] + params["b2"], 0.0)
    pooled = jnp.mean(h, axis=1)                     # global_mean_pool
    y = jnp.maximum(pooled @ params["rw0"] + params["rb0"], 0.0)
    y = jnp.maximum(y @ params["rw1"] + params["rb1"], 0.0)
    return y @ params["rw2"] + params["rb2"]


if __name__ == "__main__":
    # batch, n_graph_nodes, node_feat_size, hidden_dim, n_classes
    B, N, F, H, C = 2, 16, 4, 32, 4

    key = jax.random.PRNGKey(0)
    kx, kp = jax.random.split(key)
    x = jax.random.normal(kx, (B, N, F), jnp.float32)
    params = init_params(kp, F, H, C)

    # node_tile=8 -> 2 node tiles per graph: exercises init / accumulate / finalize.
    logits = ga_mlp_forward(x, params, node_tile=8)
    logits = jax.block_until_ready(logits)

    ref = reference_forward(x, params)
    assert logits.shape == (B, C)
    assert jnp.allclose(logits, ref, atol=1e-5, rtol=1e-5), "mismatch vs reference"

    print("KERNEL_OK")
</pallas_src>

<mosaic_0001>
module attributes {stable_mosaic.version = 11 : i64} {
  func.func @ga_mlp_kernel(%arg0: i32, %arg1: i32, %arg2: memref<1x8x4xf32, #tpu.memory_space<vmem>>, %arg3: memref<4x128xf32, #tpu.memory_space<vmem>>, %arg4: memref<1x128xf32, #tpu.memory_space<vmem>>, %arg5: memref<128x128xf32, #tpu.memory_space<vmem>>, %arg6: memref<1x128xf32, #tpu.memory_space<vmem>>, %arg7: memref<128x128xf32, #tpu.memory_space<vmem>>, %arg8: memref<1x128xf32, #tpu.memory_space<vmem>>, %arg9: memref<128x128xf32, #tpu.memory_space<vmem>>, %arg10: memref<1x128xf32, #tpu.memory_space<vmem>>, %arg11: memref<128x128xf32, #tpu.memory_space<vmem>>, %arg12: memref<1x128xf32, #tpu.memory_space<vmem>>, %arg13: memref<1x1x128xf32, #tpu.memory_space<vmem>>, %arg14: memref<1x128xf32, #tpu.memory_space<vmem>>) attributes {dimension_semantics = [#tpu.dimension_semantics<parallel>, #tpu.dimension_semantics<arbitrary>], iteration_bounds = array<i64: 2, 2>, scalar_prefetch = 0 : i64, scratch_operands = 1 : i64, tpu.core_type = #tpu.core_type<tc>, window_params = [{transform_indices = @transform_0, window_bounds = array<i64: 1, 8, 4>}, {pipeline_mode = #tpu.pipeline_mode<synchronous>, transform_indices = @transform_1, window_bounds = array<i64: 4, 128>}, {pipeline_mode = #tpu.pipeline_mode<synchronous>, transform_indices = @transform_2, window_bounds = array<i64: 1, 128>}, {pipeline_mode = #tpu.pipeline_mode<synchronous>, transform_indices = @transform_3, window_bounds = array<i64: 128, 128>}, {pipeline_mode = #tpu.pipeline_mode<synchronous>, transform_indices = @transform_4, window_bounds = array<i64: 1, 128>}, {pipeline_mode = #tpu.pipeline_mode<synchronous>, transform_indices = @transform_5, window_bounds = array<i64: 128, 128>}, {pipeline_mode = #tpu.pipeline_mode<synchronous>, transform_indices = @transform_6, window_bounds = array<i64: 1, 128>}, {pipeline_mode = #tpu.pipeline_mode<synchronous>, transform_indices = @transform_7, window_bounds = array<i64: 128, 128>}, {pipeline_mode = #tpu.pipeline_mode<synchronous>, transform_indices = @transform_8, window_bounds = array<i64: 1, 128>}, {pipeline_mode = #tpu.pipeline_mode<synchronous>, transform_indices = @transform_9, window_bounds = array<i64: 128, 128>}, {pipeline_mode = #tpu.pipeline_mode<synchronous>, transform_indices = @transform_10, window_bounds = array<i64: 1, 128>}, {transform_indices = @transform_11, window_bounds = array<i64: 1, 1, 128>}]} {
    %c0_i32 = arith.constant 0 : i32
    %0 = arith.cmpi eq, %arg1, %c0_i32 : i32
    %1 = arith.extui %0 : i1 to i32
    %c0_i32_0 = arith.constant 0 : i32
    %2 = arith.cmpi ne, %1, %c0_i32_0 : i32
    scf.if %2 {
      %cst_20 = arith.constant 0.000000e+00 : f32
      %27 = vector.broadcast %cst_20 : f32 to vector<1x128xf32>
      %c0_21 = arith.constant 0 : index
      %c0_22 = arith.constant 0 : index
      %28 = vector.load %arg14[%c0_21, %c0_22] : memref<1x128xf32, #tpu.memory_space<vmem>>, vector<1x128xf32>
      tpu.vector_store %arg14[%c0_21, %c0_22], %27 {strides = array<i32>} : memref<1x128xf32, #tpu.memory_space<vmem>>, vector<1x128xf32>,
    } else {
    }
    %c0 = arith.constant 0 : index
    %c0_1 = arith.constant 0 : index
    %c0_2 = arith.constant 0 : index
    %3 = vector.load %arg2[%c0, %c0_1, %c0_2] : memref<1x8x4xf32, #tpu.memory_space<vmem>>, vector<1x8x4xf32>
    %4 = vector.shape_cast %3 : vector<1x8x4xf32> to vector<8x4xf32>
    %c0_3 = arith.constant 0 : index
    %c0_4 = arith.constant 0 : index
    %5 = vector.load %arg3[%c0_3, %c0_4] : memref<4x128xf32, #tpu.memory_space<vmem>>, vector<4x128xf32>
    %cst = arith.constant dense<0.000000e+00> : vector<8x128xf32>
    %6 = tpu.matmul %4, %5, %cst {dimension_numbers = #tpu.dot_dimension_numbers<[1], [0], [0], [1], [0, 0, 1, 1], [], []>} : vector<8x4xf32>, vector<4x128xf32>, vector<8x128xf32> -> vector<8x128xf32>
    %c0_5 = arith.constant 0 : index
    %c0_6 = arith.constant 0 : index
    %7 = vector.load %arg4[%c0_5, %c0_6] : memref<1x128xf32, #tpu.memory_space<vmem>>, vector<1x128xf32>
    %8 = vector.broadcast %7 : vector<1x128xf32> to vector<8x128xf32>
    %9 = arith.addf %6, %8 : vector<8x128xf32>
    %cst_7 = arith.constant 0.000000e+00 : f32
    %10 = vector.broadcast %cst_7 : f32 to vector<8x128xf32>
    %11 = arith.maximumf %9, %10 : vector<8x128xf32>
    %c0_8 = arith.constant 0 : index
    %c0_9 = arith.constant 0 : index
    %12 = vector.load %arg5[%c0_8, %c0_9] : memref<128x128xf32, #tpu.memory_space<vmem>>, vector<128x128xf32>
    %cst_10 = arith.constant dense<0.000000e+00> : vector<8x128xf32>
    %13 = tpu.matmul %11, %12, %cst_10 {dimension_numbers = #tpu.dot_dimension_numbers<[1], [0], [0], [1], [0, 0, 1, 1], [], []>} : vector<8x128xf32>, vector<128x128xf32>, vector<8x128xf32> -> vector<8x128xf32>
    %c0_11 = arith.constant 0 : index
    %c0_12 = arith.constant 0 : index
    %14 = vector.load %arg6[%c0_11, %c0_12] : memref<1x128xf32, #tpu.memory_space<vmem>>, vector<1x128xf32>
    %15 = vector.broadcast %14 : vector<1x128xf32> to vector<8x128xf32>
    %16 = arith.addf %13, %15 : vector<8x128xf32>
    %cst_13 = arith.constant 0.000000e+00 : f32
    %17 = vector.broadcast %cst_13 : f32 to vector<8x128xf32>
    %18 = arith.maximumf %16, %17 : vector<8x128xf32>
    %c0_14 = arith.constant 0 : index
    %c0_15 = arith.constant 0 : index
    %19 = vector.load %arg14[%c0_14, %c0_15] : memref<1x128xf32, #tpu.memory_space<vmem>>, vector<1x128xf32>
    %cst_16 = arith.constant dense<0.000000e+00> : vector<128xf32>
    %20 = vector.multi_reduction <add>, %18, %cst_16 [0] : vector<8x128xf32> to vector<128xf32>
    %21 = vector.shape_cast %20 : vector<128xf32> to vector<1x128xf32>
    %22 = arith.addf %19, %21 : vector<1x128xf32>
    %c0_17 = arith.constant 0 : index
    %c0_18 = arith.constant 0 : index
    %23 = vector.load %arg14[%c0_17, %c0_18] : memref<1x128xf32, #tpu.memory_space<vmem>>, vector<1x128xf32>
    tpu.vector_store %arg14[%c0_17, %c0_18], %22 {strides = array<i32>} : memref<1x128xf32, #tpu.memory_space<vmem>>, vector<1x128xf32>,
    %c1_i32 = arith.constant 1 : i32
    %24 = arith.cmpi eq, %arg1, %c1_i32 : i32
    %25 = arith.extui %24 : i1 to i32
    %c0_i32_19 = arith.constant 0 : i32
    %26 = arith.cmpi ne, %25, %c0_i32_19 : i32
    scf.if %26 {
      %c0_20 = arith.constant 0 : index
      %c0_21 = arith.constant 0 : index
      %27 = vector.load %arg14[%c0_20, %c0_21] : memref<1x128xf32, #tpu.memory_space<vmem>>, vector<1x128xf32>
      %cst_22 = arith.constant 6.250000e-02 : f32
      %28 = vector.broadcast %cst_22 : f32 to vector<1x128xf32>
      %29 = arith.mulf %27, %28 : vector<1x128xf32>
      %c0_23 = arith.constant 0 : index
      %c0_24 = arith.constant 0 : index
      %30 = vector.load %arg7[%c0_23, %c0_24] : memref<128x128xf32, #tpu.memory_space<vmem>>, vector<128x128xf32>
      %cst_25 = arith.constant dense<0.000000e+00> : vector<1x128xf32>
      %31 = tpu.matmul %29, %30, %cst_25 {dimension_numbers = #tpu.dot_dimension_numbers<[1], [0], [0], [1], [0, 0, 1, 1], [], []>} : vector<1x128xf32>, vector<128x128xf32>, vector<1x128xf32> -> vector<1x128xf32>
      %c0_26 = arith.constant 0 : index
      %c0_27 = arith.constant 0 : index
      %32 = vector.load %arg8[%c0_26, %c0_27] : memref<1x128xf32, #tpu.memory_space<vmem>>, vector<1x128xf32>
      %33 = arith.addf %31, %32 : vector<1x128xf32>
      %cst_28 = arith.constant 0.000000e+00 : f32
      %34 = vector.broadcast %cst_28 : f32 to vector<1x128xf32>
      %35 = arith.maximumf %33, %34 : vector<1x128xf32>
      %c0_29 = arith.constant 0 : index
      %c0_30 = arith.constant 0 : index
      %36 = vector.load %arg9[%c0_29, %c0_30] : memref<128x128xf32, #tpu.memory_space<vmem>>, vector<128x128xf32>
      %cst_31 = arith.constant dense<0.000000e+00> : vector<1x128xf32>
      %37 = tpu.matmul %35, %36, %cst_31 {dimension_numbers = #tpu.dot_dimension_numbers<[1], [0], [0], [1], [0, 0, 1, 1], [], []>} : vector<1x128xf32>, vector<128x128xf32>, vector<1x128xf32> -> vector<1x128xf32>
      %c0_32 = arith.constant 0 : index
      %c0_33 = arith.constant 0 : index
      %38 = vector.load %arg10[%c0_32, %c0_33] : memref<1x128xf32, #tpu.memory_space<vmem>>, vector<1x128xf32>
      %39 = arith.addf %37, %38 : vector<1x128xf32>
      %cst_34 = arith.constant 0.000000e+00 : f32
      %40 = vector.broadcast %cst_34 : f32 to vector<1x128xf32>
      %41 = arith.maximumf %39, %40 : vector<1x128xf32>
      %c0_35 = arith.constant 0 : index
      %c0_36 = arith.constant 0 : index
      %42 = vector.load %arg11[%c0_35, %c0_36] : memref<128x128xf32, #tpu.memory_space<vmem>>, vector<128x128xf32>
      %cst_37 = arith.constant dense<0.000000e+00> : vector<1x128xf32>
      %43 = tpu.matmul %41, %42, %cst_37 {dimension_numbers = #tpu.dot_dimension_numbers<[1], [0], [0], [1], [0, 0, 1, 1], [], []>} : vector<1x128xf32>, vector<128x128xf32>, vector<1x128xf32> -> vector<1x128xf32>
      %c0_38 = arith.constant 0 : index
      %c0_39 = arith.constant 0 : index
      %44 = vector.load %arg12[%c0_38, %c0_39] : memref<1x128xf32, #tpu.memory_space<vmem>>, vector<1x128xf32>
      %45 = arith.addf %43, %44 : vector<1x128xf32>
      %c0_40 = arith.constant 0 : index
      %c0_41 = arith.constant 0 : index
      %c0_42 = arith.constant 0 : index
      %46 = vector.load %arg13[%c0_40, %c0_41, %c0_42] : memref<1x1x128xf32, #tpu.memory_space<vmem>>, vector<1x1x128xf32>
      %47 = vector.shape_cast %46 : vector<1x1x128xf32> to vector<1x128xf32>
      %48 = vector.shape_cast %45 : vector<1x128xf32> to vector<1x1x128xf32>
      tpu.vector_store %arg13[%c0_40, %c0_41, %c0_42], %48 {strides = array<i32>} : memref<1x1x128xf32, #tpu.memory_space<vmem>>, vector<1x1x128xf32>,
    } else {
    }
    return
  }
  func.func @transform_0(%arg0: i32, %arg1: i32) -> (i32, i32, i32) {
    %c0_i32 = arith.constant 0 : i32
    %c0_i32_0 = arith.constant 0 : i32
    return %arg0, %arg1, %c0_i32 : i32, i32, i32
  }
  func.func @transform_1(%arg0: i32, %arg1: i32) -> (i32, i32) {
    %c0_i32 = arith.constant 0 : i32
    %c0_i32_0 = arith.constant 0 : i32
    %c0_i32_1 = arith.constant 0 : i32
    return %c0_i32, %c0_i32_0 : i32, i32
  }
  func.func @transform_2(%arg0: i32, %arg1: i32) -> (i32, i32) {
    %c0_i32 = arith.constant 0 : i32
    %c0_i32_0 = arith.constant 0 : i32
    %c0_i32_1 = arith.constant 0 : i32
    return %c0_i32, %c0_i32_0 : i32, i32
  }
  func.func @transform_3(%arg0: i32, %arg1: i32) -> (i32, i32) {
    %c0_i32 = arith.constant 0 : i32
    %c0_i32_0 = arith.constant 0 : i32
    %c0_i32_1 = arith.constant 0 : i32
    return %c0_i32, %c0_i32_0 : i32, i32
  }
  func.func @transform_4(%arg0: i32, %arg1: i32) -> (i32, i32) {
    %c0_i32 = arith.constant 0 : i32
    %c0_i32_0 = arith.constant 0 : i32
    %c0_i32_1 = arith.constant 0 : i32
    return %c0_i32, %c0_i32_0 : i32, i32
  }
  func.func @transform_5(%arg0: i32, %arg1: i32) -> (i32, i32) {
    %c0_i32 = arith.constant 0 : i32
    %c0_i32_0 = arith.constant 0 : i32
    %c0_i32_1 = arith.constant 0 : i32
    return %c0_i32, %c0_i32_0 : i32, i32
  }
  func.func @transform_6(%arg0: i32, %arg1: i32) -> (i32, i32) {
    %c0_i32 = arith.constant 0 : i32
    %c0_i32_0 = arith.constant 0 : i32
    %c0_i32_1 = arith.constant 0 : i32
    return %c0_i32, %c0_i32_0 : i32, i32
  }
  func.func @transform_7(%arg0: i32, %arg1: i32) -> (i32, i32) {
    %c0_i32 = arith.constant 0 : i32
    %c0_i32_0 = arith.constant 0 : i32
    %c0_i32_1 = arith.constant 0 : i32
    return %c0_i32, %c0_i32_0 : i32, i32
  }
  func.func @transform_8(%arg0: i32, %arg1: i32) -> (i32, i32) {
    %c0_i32 = arith.constant 0 : i32
    %c0_i32_0 = arith.constant 0 : i32
    %c0_i32_1 = arith.constant 0 : i32
    return %c0_i32, %c0_i32_0 : i32, i32
  }
  func.func @transform_9(%arg0: i32, %arg1: i32) -> (i32, i32) {
    %c0_i32 = arith.constant 0 : i32
    %c0_i32_0 = arith.constant 0 : i32
    %c0_i32_1 = arith.constant 0 : i32
    return %c0_i32, %c0_i32_0 : i32, i32
  }
  func.func @transform_10(%arg0: i32, %arg1: i32) -> (i32, i32) {
    %c0_i32 = arith.constant 0 : i32
    %c0_i32_0 = arith.constant 0 : i32
    %c0_i32_1 = arith.constant 0 : i32
    return %c0_i32, %c0_i32_0 : i32, i32
  }
  func.func @transform_11(%arg0: i32, %arg1: i32) -> (i32, i32, i32) {
    %c0_i32 = arith.constant 0 : i32
    %c0_i32_0 = arith.constant 0 : i32
    %c0_i32_1 = arith.constant 0 : i32
    return %arg0, %c0_i32, %c0_i32_0 : i32, i32, i32
  }
}

</mosaic_0001>

<llo_original>
// kernel: tpu_custom_call.1
$region0: #{tpu_custom_call.1}
  #allocation0 [shape = 'u32[]', space=smem, size = 0x4, offset = 0x4, fixed_abs, tag = 'smem constant byte address 0x4 - core index']
  #allocation1 [shape = 'u32[144,128]{1,0:T(1,128)}', space=vmem, size = 0x12000, scoped, tag = 'internal scratch']
  #allocation2 [shape = 'f32[1,128]{1,0:T(1,128)}', space=vmem, size = 0x200, scoped, tag = 'scratch operand']
  %s0 = inlined_call_operand.vmem [shape: f32[2,16,4], index: 0, kind: input, shape index: {}]
  %s1 = inlined_call_operand.vmem [shape: f32[4,128], index: 1, kind: input, shape index: {}]
  %s2 = inlined_call_operand.vmem [shape: f32[1,128], index: 2, kind: input, shape index: {}]
  %s3 = inlined_call_operand.hbm [shape: f32[128,128], index: 3, kind: input, shape index: {}]
  %s4 = inlined_call_operand.vmem [shape: f32[1,128], index: 4, kind: input, shape index: {}]
  %s5 = inlined_call_operand.hbm [shape: f32[128,128], index: 5, kind: input, shape index: {}]
  %s6 = inlined_call_operand.vmem [shape: f32[1,128], index: 6, kind: input, shape index: {}]
  %s7 = inlined_call_operand.hbm [shape: f32[128,128], index: 7, kind: input, shape index: {}]
  %s8 = inlined_call_operand.vmem [shape: f32[1,128], index: 8, kind: input, shape index: {}]
  %s9 = inlined_call_operand.hbm [shape: f32[128,128], index: 9, kind: input, shape index: {}]
  %s10 = inlined_call_operand.vmem [shape: f32[1,128], index: 10, kind: input, shape index: {}]
  %s11 = inlined_call_operand.hbm [shape: f32[2,1,128], index: 11, kind: output, shape index: {}]
  %s12 = sld [smem:[#allocation0]]
  $region101: #{tpu_custom_call.1} parent=0
    _
  %s14 = ssub.s32 1, %s12
  %s15 = scalar_select 0, %s14, %s12
  $region1: #{tpu_custom_call.1} parent=0
    #allocation3 [shape = 'u8[65536]{0}', space=vmem, size = 0x10000, scoped, tag = 'input window, operand 3, single buffered']
    #allocation4 [shape = 's32[2]{0}', space=sflag, size = 0x8, scoped, tag = 'scoped memory for tpu_custom_call.1']
    #allocation5 [shape = 's32[2]{0}', space=sflag, size = 0x8, scoped, tag = 'scoped memory for tpu_custom_call.1']
    #allocation6 [shape = 'u8[65536]{0}', space=vmem, size = 0x10000, scoped, tag = 'input window, operand 5, single buffered']
    #allocation7 [shape = 's32[1]{0}', space=sflag, size = 0x4, scoped, tag = 'scoped memory for tpu_custom_call.1']
    #allocation8 [shape = 'u8[65536]{0}', space=vmem, size = 0x10000, scoped, tag = 'input window, operand 7, single buffered']
    #allocation9 [shape = 'u8[65536]{0}', space=vmem, size = 0x10000, scoped, tag = 'input window, operand 9, single buffered']
    #allocation10 [shape = 's32[1]{0}', space=sflag, size = 0x4, scoped, tag = 'scoped memory for tpu_custom_call.1']
    #allocation11 [shape = 'u8[1024]{0}', space=vmem, size = 0x400, scoped, tag = 'output window, operand 0']
    %16 = vsyncpa [#allocation4], 0
    %17 = vsyncpa [#allocation7], 0
    %18 = vsyncpa [#allocation10], 0
    %19 = vsyncpa [#allocation5], 0
    %s20 = scalar_lea.sflag [#allocation5], 1
    %21 = vsyncpa %s20, 0
    loop: start=0, step=1, limit=6
    $region2: #{tpu_custom_call.1} parent=1 // loop_pre_header
      _
    $region3: #{tpu_custom_call.1} parent=1 // loop_header
      %s23 = sphi 0, %s27
      %p24 = scmp.ge.s32.totalorder %s23, 6
      %s30 = sphi 0, %s42
      %s31 = sphi 0, %s38
      %s32 = sphi 0, %s30
      %s33 = sphi 0, %s31
      %s34 = sphi 0, %s32
      %s35 = sphi 0, %s33
      %s47 = sphi 0, %s49
      %s50 = sphi 0, %s47
      %s51 = sphi 0, %s50
      %s67 = sphi 0, %s51
      %s71 = sphi 0, %s71
      %s73 = sphi 0, %s71
      %s74 = sphi 0, %s73
      %s88 = sphi 0, %s74
      %s92 = sphi 0, %s92
      %s94 = sphi 0, %s92
      %s95 = sphi 0, %s94
      %s109 = sphi 0, %s95
      %s113 = sphi 0, %s113
      %s115 = sphi 0, %s113
      %s116 = sphi 0, %s115
      %s130 = sphi 0, %s116
      %s134 = sphi 0, %s134
      %s136 = sphi 0, %s134
      %s137 = sphi 0, %s136
      %s151 = sphi 0, %s137
      %s155 = sphi 0, %s155
      %s157 = sphi 0, %s155
      %s158 = sphi 0, %s157
      %s172 = sphi 0, %s158
      %s176 = sphi 0, %s176
      %s178 = sphi 0, %s176
      %s179 = sphi 0, %s178
      %s193 = sphi 0, %s179
      %s197 = sphi 0, %s197
      %s199 = sphi 0, %s197
      %s200 = sphi 0, %s199
      %s214 = sphi 0, %s200
      %s218 = sphi 0, %s218
      %s220 = sphi 0, %s218
      %s221 = sphi 0, %s220
      %s235 = sphi 0, %s221
      %s239 = sphi 0, %s239
      %s241 = sphi 0, %s239
      %s242 = sphi 0, %s241
      %s256 = sphi 0, %s242
      %s260 = sphi 0, %s260
      %s262 = sphi 0, %s260
      %s263 = sphi 0, %s262
      %s277 = sphi 0, %s263
      %s283 = sphi 0, %s285
      %s286 = sphi 0, %s283
      %s287 = sphi 0, %s286
      %s303 = sphi 0, %s287
    $region4: #{tpu_custom_call.1} parent=1 // loop_header_branch
      %26 = sbr.rel (%p24) target = $region8
    $region5: #{tpu_custom_call.1} parent=1 // loop_body
      %s28 = ssub.s32 %s23, 1
      %s29 = ssub.s32 %s23, 2
      %s36 = sadd.s32 1, %s31
      %p37 = scmp.ge.s32.totalorder %s36, 2
      %s38 = scalar_select %p37, 0, %s36
      %s39 = sadd.s32 1, %s30
      %s40 = scalar_select %p37, %s39, %s30
      %p41 = scmp.ge.s32.totalorder %s40, 2
      %s42 = scalar_select %p41, 0, %s40
      %s43 = ssub.s32 %s30, %s42
      %s44 = ssub.s32 %s31, %s38
      %s45 = sor.u32 %s43, %s44
      %p46 = scmp.eq.s32.totalorder %s45, 0
      %s48 = sadd.s32 %s47, 1
      %s49 = scalar_select %p46, %s47, %s48
      %p52 = pneg %p46
      %p53 = scmp.eq.s32.totalorder %s23, 3
      %p54 = por %p52, %p53
      %p55 = scmp.ne.s32.totalorder %s47, %s50
      %p56 = scmp.eq.s32.totalorder %s23, 0
      %p57 = por %p55, %p56
      %p58 = scmp.ne.s32.totalorder %s47, %s50
      %p59 = scmp.eq.s32.totalorder %s28, 3
      %p60 = por %p58, %p59
      %p61 = scmp.ne.s32.totalorder %s50, %s51
      %p62 = scmp.eq.s32.totalorder %s28, 0
      %p63 = por %p61, %p62
      %p64 = scmp.ne.s32.totalorder %s50, %s51
      %p65 = scmp.eq.s32.totalorder %s29, 3
      %p66 = por %p64, %p65
      %p68 = scmp.ne.s32.totalorder %s51, %s67
      %p69 = scmp.eq.s32.totalorder %s29, 0
      %p70 = por %p68, %p69
      %s72 = sadd.s32 %s71, 1
      %p75 = scmp.eq.s32.totalorder %s23, 3
      %p76 = scmp.ne.s32.totalorder %s71, %s73
      %p77 = scmp.eq.s32.totalorder %s23, 0
      %p78 = por %p76, %p77
      %p79 = scmp.ne.s32.totalorder %s71, %s73
      %p80 = scmp.eq.s32.totalorder %s28, 3
      %p81 = por %p79, %p80
      %p82 = scmp.ne.s32.totalorder %s73, %s74
      %p83 = scmp.eq.s32.totalorder %s28, 0
      %p84 = por %p82, %p83
      %p85 = scmp.ne.s32.totalorder %s73, %s74
      %p86 = scmp.eq.s32.totalorder %s29, 3
      %p87 = por %p85, %p86
      %p89 = scmp.ne.s32.totalorder %s74, %s88
      %p90 = scmp.eq.s32.totalorder %s29, 0
      %p91 = por %p89, %p90
      %s93 = sadd.s32 %s92, 1
      %p96 = scmp.eq.s32.totalorder %s23, 3
      %p97 = scmp.ne.s32.totalorder %s92, %s94
      %p98 = scmp.eq.s32.totalorder %s23, 0
      %p99 = por %p97, %p98
      %p100 = scmp.ne.s32.totalorder %s92, %s94
      %p101 = scmp.eq.s32.totalorder %s28, 3
      %p102 = por %p100, %p101
      %p103 = scmp.ne.s32.totalorder %s94, %s95
      %p104 = scmp.eq.s32.totalorder %s28, 0
      %p105 = por %p103, %p104
      %p106 = scmp.ne.s32.totalorder %s94, %s95
      %p107 = scmp.eq.s32.totalorder %s29, 3
      %p108 = por %p106, %p107
      %p110 = scmp.ne.s32.totalorder %s95, %s109
      %p111 = scmp.eq.s32.totalorder %s29, 0
      %p112 = por %p110, %p111
      %s114 = sadd.s32 %s113, 1
      %p117 = scmp.eq.s32.totalorder %s23, 3
      %p118 = scmp.ne.s32.totalorder %s113, %s115
      %p119 = scmp.eq.s32.totalorder %s23, 0
      %p120 = por %p118, %p119
      %p121 = scmp.ne.s32.totalorder %s113, %s115
      %p122 = scmp.eq.s32.totalorder %s28, 3
      %p123 = por %p121, %p122
      %p124 = scmp.ne.s32.totalorder %s115, %s116
      %p125 = scmp.eq.s32.totalorder %s28, 0
      %p126 = por %p124, %p125
      %p127 = scmp.ne.s32.totalorder %s115, %s116
      %p128 = scmp.eq.s32.totalorder %s29, 3
      %p129 = por %p127, %p128
      %p131 = scmp.ne.s32.totalorder %s116, %s130
      %p132 = scmp.eq.s32.totalorder %s29, 0
      %p133 = por %p131, %p132
      %s135 = sadd.s32 %s134, 1
      %p138 = scmp.eq.s32.totalorder %s23, 3
      %p139 = scmp.ne.s32.totalorder %s134, %s136
      %p140 = scmp.eq.s32.totalorder %s23, 0
      %p141 = por %p139, %p140
      %p142 = scmp.ne.s32.totalorder %s134, %s136
      %p143 = scmp.eq.s32.totalorder %s28, 3
      %p144 = por %p142, %p143
      %p145 = scmp.ne.s32.totalorder %s136, %s137
      %p146 = scmp.eq.s32.totalorder %s28, 0
      %p147 = por %p145, %p146
      %p148 = scmp.ne.s32.totalorder %s136, %s137
      %p149 = scmp.eq.s32.totalorder %s29, 3
      %p150 = por %p148, %p149
      %p152 = scmp.ne.s32.totalorder %s137, %s151
      %p153 = scmp.eq.s32.totalorder %s29, 0
      %p154 = por %p152, %p153
      %s156 = sadd.s32 %s155, 1
      %p159 = scmp.eq.s32.totalorder %s23, 3
      %p160 = scmp.ne.s32.totalorder %s155, %s157
      %p161 = scmp.eq.s32.totalorder %s23, 0
      %p162 = por %p160, %p161
      %p163 = scmp.ne.s32.totalorder %s155, %s157
      %p164 = scmp.eq.s32.totalorder %s28, 3
      %p165 = por %p163, %p164
      %p166 = scmp.ne.s32.totalorder %s157, %s158
      %p167 = scmp.eq.s32.totalorder %s28, 0
      %p168 = por %p166, %p167
      %p169 = scmp.ne.s32.totalorder %s157, %s158
      %p170 = scmp.eq.s32.totalorder %s29, 3
      %p171 = por %p169, %p170
      %p173 = scmp.ne.s32.totalorder %s158, %s172
      %p174 = scmp.eq.s32.totalorder %s29, 0
      %p175 = por %p173, %p174
      %s177 = sadd.s32 %s176, 1
      %p180 = scmp.eq.s32.totalorder %s23, 3
      %p181 = scmp.ne.s32.totalorder %s176, %s178
      %p182 = scmp.eq.s32.totalorder %s23, 0
      %p183 = por %p181, %p182
      %p184 = scmp.ne.s32.totalorder %s176, %s178
      %p185 = scmp.eq.s32.totalorder %s28, 3
      %p186 = por %p184, %p185
      %p187 = scmp.ne.s32.totalorder %s178, %s179
      %p188 = scmp.eq.s32.totalorder %s28, 0
      %p189 = por %p187, %p188
      %p190 = scmp.ne.s32.totalorder %s178, %s179
      %p191 = scmp.eq.s32.totalorder %s29, 3
      %p192 = por %p190, %p191
      %p194 = scmp.ne.s32.totalorder %s179, %s193
      %p195 = scmp.eq.s32.totalorder %s29, 0
      %p196 = por %p194, %p195
      %s198 = sadd.s32 %s197, 1
      %p201 = scmp.eq.s32.totalorder %s23, 3
      %p202 = scmp.ne.s32.totalorder %s197, %s199
      %p203 = scmp.eq.s32.totalorder %s23, 0
      %p204 = por %p202, %p203
      %p205 = scmp.ne.s32.totalorder %s197, %s199
      %p206 = scmp.eq.s32.totalorder %s28, 3
      %p207 = por %p205, %p206
      %p208 = scmp.ne.s32.totalorder %s199, %s200
      %p209 = scmp.eq.s32.totalorder %s28, 0
      %p210 = por %p208, %p209
      %p211 = scmp.ne.s32.totalorder %s199, %s200
      %p212 = scmp.eq.s32.totalorder %s29, 3
      %p213 = por %p211, %p212
      %p215 = scmp.ne.s32.totalorder %s200, %s214
      %p216 = scmp.eq.s32.totalorder %s29, 0
      %p217 = por %p215, %p216
      %s219 = sadd.s32 %s218, 1
      %p222 = scmp.eq.s32.totalorder %s23, 3
      %p223 = scmp.ne.s32.totalorder %s218, %s220
      %p224 = scmp.eq.s32.totalorder %s23, 0
      %p225 = por %p223, %p224
      %p226 = scmp.ne.s32.totalorder %s218, %s220
      %p227 = scmp.eq.s32.totalorder %s28, 3
      %p228 = por %p226, %p227
      %p229 = scmp.ne.s32.totalorder %s220, %s221
      %p230 = scmp.eq.s32.totalorder %s28, 0
      %p231 = por %p229, %p230
      %p232 = scmp.ne.s32.totalorder %s220, %s221
      %p233 = scmp.eq.s32.totalorder %s29, 3
      %p234 = por %p232, %p233
      %p236 = scmp.ne.s32.totalorder %s221, %s235
      %p237 = scmp.eq.s32.totalorder %s29, 0
      %p238 = por %p236, %p237
      %s240 = sadd.s32 %s239, 1
      %p243 = scmp.eq.s32.totalorder %s23, 3
      %p244 = scmp.ne.s32.totalorder %s239, %s241
      %p245 = scmp.eq.s32.totalorder %s23, 0
      %p246 = por %p244, %p245
      %p247 = scmp.ne.s32.totalorder %s239, %s241
      %p248 = scmp.eq.s32.totalorder %s28, 3
      %p249 = por %p247, %p248
      %p250 = scmp.ne.s32.totalorder %s241, %s242
      %p251 = scmp.eq.s32.totalorder %s28, 0
      %p252 = por %p250, %p251
      %p253 = scmp.ne.s32.totalorder %s241, %s242
      %p254 = scmp.eq.s32.totalorder %s29, 3
      %p255 = por %p253, %p254
      %p257 = scmp.ne.s32.totalorder %s242, %s256
      %p258 = scmp.eq.s32.totalorder %s29, 0
      %p259 = por %p257, %p258
      %s261 = sadd.s32 %s260, 1
      %p264 = scmp.eq.s32.totalorder %s23, 3
      %p265 = scmp.ne.s32.totalorder %s260, %s262
      %p266 = scmp.eq.s32.totalorder %s23, 0
      %p267 = por %p265, %p266
      %p268 = scmp.ne.s32.totalorder %s260, %s262
      %p269 = scmp.eq.s32.totalorder %s28, 3
      %p270 = por %p268, %p269
      %p271 = scmp.ne.s32.totalorder %s262, %s263
      %p272 = scmp.eq.s32.totalorder %s28, 0
      %p273 = por %p271, %p272
      %p274 = scmp.ne.s32.totalorder %s262, %s263
      %p275 = scmp.eq.s32.totalorder %s29, 3
      %p276 = por %p274, %p275
      %p278 = scmp.ne.s32.totalorder %s263, %s277
      %p279 = scmp.eq.s32.totalorder %s29, 0
      %p280 = por %p278, %p279
      %s281 = ssub.s32 %s30, %s42
      %p282 = scmp.eq.s32.totalorder %s281, 0
      %s284 = sadd.s32 %s283, 1
      %s285 = scalar_select %p282, %s283, %s284
      %p288 = pneg %p282
      %p289 = scmp.eq.s32.totalorder %s23, 3
      %p290 = por %p288, %p289
      %p291 = scmp.ne.s32.totalorder %s283, %s286
      %p292 = scmp.eq.s32.totalorder %s23, 0
      %p293 = por %p291, %p292
      %p294 = scmp.ne.s32.totalorder %s283, %s286
      %p295 = scmp.eq.s32.totalorder %s28, 3
      %p296 = por %p294, %p295
      %p297 = scmp.ne.s32.totalorder %s286, %s287
      %p298 = scmp.eq.s32.totalorder %s28, 0
      %p299 = por %p297, %p298
      %p300 = scmp.ne.s32.totalorder %s286, %s287
      %p301 = scmp.eq.s32.totalorder %s29, 3
      %p302 = por %p300, %p301
      %p304 = scmp.ne.s32.totalorder %s287, %s303
      %p305 = scmp.eq.s32.totalorder %s29, 0
      %p306 = por %p304, %p305
      %p307 = scmp.le.s32.totalorder 1, %s23
      %p308 = scmp.lt.s32.totalorder %s23, 5
      %p309 = pnand %p307, %p308
      %p310 = pneg %p309
      // Predicated region
      $region9: #{tpu_custom_call.1} parent=5 // pred_check
        _
      $region10: #{tpu_custom_call.1} parent=5 // pred_check_branch
        %312 = sbr.rel (%p309) target = $region12
      $region11: #{tpu_custom_call.1} parent=5 // pred_region
        %s313 = ssub.s32 %s23, 1
        // Predicated region
        $region13: #{tpu_custom_call.1} parent=11 // pred_check
          %p314 = pneg %p84
        $region14: #{tpu_custom_call.1} parent=11 // pred_check_branch
          %316 = sbr.rel (%p314) target = $region16
        $region15: #{tpu_custom_call.1} parent=11 // pred_region
          _
        $region16: #{tpu_custom_call.1} parent=11 // pred_fallthru
          _
        // Predicated region
        $region17: #{tpu_custom_call.1} parent=11 // pred_check
          %p317 = pneg %p105
        $region18: #{tpu_custom_call.1} parent=11 // pred_check_branch
          %319 = sbr.rel (%p317) target = $region20
        $region19: #{tpu_custom_call.1} parent=11 // pred_region
          _
        $region20: #{tpu_custom_call.1} parent=11 // pred_fallthru
          _
        // Predicated region
        $region21: #{tpu_custom_call.1} parent=11 // pred_check
          %p320 = pneg %p126
        $region22: #{tpu_custom_call.1} parent=11 // pred_check_branch
          %322 = sbr.rel (%p320) target = $region24
        $region23: #{tpu_custom_call.1} parent=11 // pred_region
          %s324 = ssub.s32 2048, 2048
          %325 = vsyncadd [#allocation4], %s324
          %s326 = sshll.u32 [#allocation3], 4
          %s327 = int_to_ptr.vmem [resolvable:$true] %s326
          %332 = dma.hbm_to_vmem [thread:$0]  %s3, 2048, %s327, [#allocation4], 128, 128, 8
        $region24: #{tpu_custom_call.1} parent=11 // pred_fallthru
          _
        // Predicated region
        $region25: #{tpu_custom_call.1} parent=11 // pred_check
          %p333 = pneg %p147
        $region26: #{tpu_custom_call.1} parent=11 // pred_check_branch
          %335 = sbr.rel (%p333) target = $region28
        $region27: #{tpu_custom_call.1} parent=11 // pred_region
          _
        $region28: #{tpu_custom_call.1} parent=11 // pred_fallthru
          _
        // Predicated region
        $region29: #{tpu_custom_call.1} parent=11 // pred_check
          %p336 = pneg %p168
        $region30: #{tpu_custom_call.1} parent=11 // pred_check_branch
          %338 = sbr.rel (%p336) target = $region32
        $region31: #{tpu_custom_call.1} parent=11 // pred_region
          %s340 = ssub.s32 2048, 2048
          %341 = vsyncadd [#allocation7], %s340
          %s342 = sshll.u32 [#allocation6], 4
          %s343 = int_to_ptr.vmem [resolvable:$true] %s342
          %348 = dma.hbm_to_vmem [thread:$0]  %s5, 2048, %s343, [#allocation7], 128, 128, 8
        $region32: #{tpu_custom_call.1} parent=11 // pred_fallthru
          _
        // Predicated region
        $region33: #{tpu_custom_call.1} parent=11 // pred_check
          %p349 = pneg %p189
        $region34: #{tpu_custom_call.1} parent=11 // pred_check_branch
          %351 = sbr.rel (%p349) target = $region36
        $region35: #{tpu_custom_call.1} parent=11 // pred_region
          _
        $region36: #{tpu_custom_call.1} parent=11 // pred_fallthru
          _
        // Predicated region
        $region37: #{tpu_custom_call.1} parent=11 // pred_check
          %p352 = pneg %p210
        $region38: #{tpu_custom_call.1} parent=11 // pred_check_branch
          %354 = sbr.rel (%p352) target = $region40
        $region39: #{tpu_custom_call.1} parent=11 // pred_region
          %s356 = ssub.s32 2048, 2048
          %357 = vsyncadd [#allocation7], %s356
          %s358 = sshll.u32 [#allocation8], 4
          %s359 = int_to_ptr.vmem [resolvable:$true] %s358
          %364 = dma.hbm_to_vmem [thread:$0]  %s7, 2048, %s359, [#allocation7], 128, 128, 8
        $region40: #{tpu_custom_call.1} parent=11 // pred_fallthru
          _
        // Predicated region
        $region41: #{tpu_custom_call.1} parent=11 // pred_check
          %p365 = pneg %p231
        $region42: #{tpu_custom_call.1} parent=11 // pred_check_branch
          %367 = sbr.rel (%p365) target = $region44
        $region43: #{tpu_custom_call.1} parent=11 // pred_region
          _
        $region44: #{tpu_custom_call.1} parent=11 // pred_fallthru
          _
        // Predicated region
        $region45: #{tpu_custom_call.1} parent=11 // pred_check
          %p368 = pneg %p252
        $region46: #{tpu_custom_call.1} parent=11 // pred_check_branch
          %370 = sbr.rel (%p368) target = $region48
        $region47: #{tpu_custom_call.1} parent=11 // pred_region
          %s372 = ssub.s32 2048, 2048
          %373 = vsyncadd [#allocation10], %s372
          %s374 = sshll.u32 [#allocation9], 4
          %s375 = int_to_ptr.vmem [resolvable:$true] %s374
          %380 = dma.hbm_to_vmem [thread:$0]  %s9, 2048, %s375, [#allocation10], 128, 128, 8
        $region48: #{tpu_custom_call.1} parent=11 // pred_fallthru
          _
        // Predicated region
        $region49: #{tpu_custom_call.1} parent=11 // pred_check
          %p381 = pneg %p273
        $region50: #{tpu_custom_call.1} parent=11 // pred_check_branch
          %383 = sbr.rel (%p381) target = $region52
        $region51: #{tpu_custom_call.1} parent=11 // pred_region
          _
        $region52: #{tpu_custom_call.1} parent=11 // pred_fallthru
          _
      $region12: #{tpu_custom_call.1} parent=5 // pred_fallthru
        _
      %p384 = scmp.lt.s32.totalorder %s23, 4
      // Predicated region
      $region53: #{tpu_custom_call.1} parent=5 // pred_check
        %p385 = pneg %p384
      $region54: #{tpu_custom_call.1} parent=5 // pred_check_branch
        %387 = sbr.rel (%p385) target = $region56
      $region55: #{tpu_custom_call.1} parent=5 // pred_region
        // Predicated region
        $region57: #{tpu_custom_call.1} parent=55 // pred_check
          %p388 = pneg %p57
        $region58: #{tpu_custom_call.1} parent=55 // pred_check_branch
          %390 = sbr.rel (%p388) target = $region60
        $region59: #{tpu_custom_call.1} parent=55 // pred_region
          %p391 = scmp.lt.s32.totalorder %s30, 1
          %s392 = scalar_select %p391, %s30, 1
          %p393 = scmp.lt.s32.totalorder %s31, 1
          %s394 = scalar_select %p393, %s31, 1
          %s395 = smul.addr %s392, 2
          %s396 = sadd.s32 %s394, %s395
          %s397 = smul.addr %s396, 8
          %s398 = scalar_lea.vmem %s0, %s397
        $region60: #{tpu_custom_call.1} parent=55 // pred_fallthru
          _
      $region56: #{tpu_custom_call.1} parent=5 // pred_fallthru
        _
      %p399 = scmp.le.s32.totalorder 1, %s23
      %p400 = scmp.lt.s32.totalorder %s23, 5
      %p401 = pnand %p399, %p400
      %p402 = pneg %p401
      // Predicated region
      $region61: #{tpu_custom_call.1} parent=5 // pred_check
        _
      $region62: #{tpu_custom_call.1} parent=5 // pred_check_branch
        %404 = sbr.rel (%p401) target = $region64
      $region63: #{tpu_custom_call.1} parent=5 // pred_region
        %s405 = ssub.s32 %s23, 1
        // Predicated region
        $region65: #{tpu_custom_call.1} parent=63 // pred_check
          %p406 = pneg %p126
        $region66: #{tpu_custom_call.1} parent=63 // pred_check_branch
          %408 = sbr.rel (%p406) target = $region68
        $region67: #{tpu_custom_call.1} parent=63 // pred_region
          %409 = dma.done [#allocation4], 2048
        $region68: #{tpu_custom_call.1} parent=63 // pred_fallthru
          _
        // Predicated region
        $region69: #{tpu_custom_call.1} parent=63 // pred_check
          %p410 = pneg %p168
        $region70: #{tpu_custom_call.1} parent=63 // pred_check_branch
          %412 = sbr.rel (%p410) target = $region72
        $region71: #{tpu_custom_call.1} parent=63 // pred_region
          %413 = dma.done [#allocation7], 2048
        $region72: #{tpu_custom_call.1} parent=63 // pred_fallthru
          _
        // Predicated region
        $region73: #{tpu_custom_call.1} parent=63 // pred_check
          %p414 = pneg %p210
        $region74: #{tpu_custom_call.1} parent=63 // pred_check_branch
          %416 = sbr.rel (%p414) target = $region76
        $region75: #{tpu_custom_call.1} parent=63 // pred_region
          %417 = dma.done [#allocation7], 2048
        $region76: #{tpu_custom_call.1} parent=63 // pred_fallthru
          _
        // Predicated region
        $region77: #{tpu_custom_call.1} parent=63 // pred_check
          %p418 = pneg %p252
        $region78: #{tpu_custom_call.1} parent=63 // pred_check_branch
          %420 = sbr.rel (%p418) target = $region80
        $region79: #{tpu_custom_call.1} parent=63 // pred_region
          %421 = dma.done [#allocation10], 2048
        $region80: #{tpu_custom_call.1} parent=63 // pred_fallthru
          _
        %p422 = scmp.lt.s32.totalorder %s32, 1
        %s423 = scalar_select %p422, %s32, 1
        %p424 = scmp.lt.s32.totalorder %s33, 1
        %s425 = scalar_select %p424, %s33, 1
        %s426 = smul.addr %s423, 2
        %s427 = sadd.s32 %s425, %s426
        %s428 = smul.addr %s427, 8
        %s429 = scalar_lea.vmem %s0, %s428
        %p430 = pneg %p63
        %p431 = pneg %p60
        %p432 = pneg %p84
        %p433 = pneg %p81
        %p434 = pneg %p105
        %p435 = pneg %p102
        %p436 = pneg %p126
        %p437 = pneg %p123
        %p438 = pneg %p147
        %p439 = pneg %p144
        %p440 = pneg %p168
        %p441 = pneg %p165
        %p442 = pneg %p189
        %p443 = pneg %p186
        %p444 = pneg %p210
        %p445 = pneg %p207
        %p446 = pneg %p231
        %p447 = pneg %p228
        %p448 = pneg %p252
        %p449 = pneg %p249
        %p450 = pneg %p273
        %p451 = pneg %p270
        %p452 = pneg %p299
        %p453 = pneg %p296
        %s454 = sand.u32 %s286, 1
        %s455 = scalar_lea.sflag [#allocation5], %s454
        %s456 = sand.u32 %s286, 1
        %s457 = scalar_lea.vmem [#allocation11], %s456
        %p458 = scmp.lt.s32.totalorder %s32, 1
        %s459 = scalar_select %p458, %s32, 1
        %p460 = scmp.lt.s32.totalorder %s33, 1
        %s461 = scalar_select %p460, %s33, 1
        %s462 = smul.addr %s459, 2
        %s463 = sadd.s32 %s461, %s462
        %s464 = smul.addr %s463, 8
        %s465 = scalar_lea.vmem %s0, %s464
        %p466 = scmp.eq.s32.totalorder %s33, 0
        // Predicated region
        $region81: #{tpu_custom_call.1} parent=63 // pred_check
          %p467 = pneg %p466
        $region82: #{tpu_custom_call.1} parent=63 // pred_check_branch
          %469 = sbr.rel (%p467) target = $region84
        $region83: #{tpu_custom_call.1} parent=63 // pred_region
          %470 = vst [vmem:[#allocation2] sm:$0x1] 0.0
        $region84: #{tpu_custom_call.1} parent=63 // pred_fallthru
          _
        %v471 = vld [vmem:[%s465] sm:$0xff]
        %v472 = vld [vmem:[%s1] sm:$0xf]
        %v473 = vld [vmem:[%s2] sm:$0x1]
        %v475 = vlaneseq
        %v476 = vshrl.u32 %v475, 7
        %v477 = vsub.s32 0, %v476
        %v478 = vrot.slane %v473, %v477
        %vm480 = vcmask 31744
        %v482 = vsel %vm480, %v471, 0
        %vm484 = vcmask 1043456
        %v486 = vsel %vm484, %v472, 0
        %488 = vmatprep.subr.mxu0 0.0
        %489 = vmatpush1.msra.mxu0 %v486
        %490 = vmatprep.subr.mxu0 0.0
        %491 = vmatpush1.msra.mxu0 0.0
        %492 = vmatprep.subr.mxu0 0.0
        %493 = vmatpush1.msra.mxu0 0.0
        %494 = vmatprep.subr.mxu0 0.0
        %495 = vmatpush1.msra.mxu0 0.0
        %496 = vmatprep.subr.mxu0 0.0
        %497 = vmatpush1.msra.mxu0 0.0
        %498 = vmatprep.subr.mxu0 0.0
        %499 = vmatpush1.msra.mxu0 0.0
        %500 = vmatprep.subr.mxu0 0.0
        %501 = vmatpush1.msra.mxu0 0.0
        %502 = vmatprep.subr.mxu0 0.0
        %503 = vmatpush1.msra.mxu0 0.0
        %504 = vmatprep.subr.mxu0 0.0
        %505 = vmatpush1.msra.mxu0 0.0
        %506 = vmatprep.subr.mxu0 0.0
        %507 = vmatpush1.msra.mxu0 0.0
        %508 = vmatprep.subr.mxu0 0.0
        %509 = vmatpush1.msra.mxu0 0.0
        %510 = vmatprep.subr.mxu0 0.0
        %511 = vmatpush1.msra.mxu0 0.0
        %512 = vmatprep.subr.mxu0 0.0
        %513 = vmatpush1.msra.mxu0 0.0
        %514 = vmatprep.subr.mxu0 0.0
        %515 = vmatpush1.msra.mxu0 0.0
        %516 = vmatprep.subr.mxu0 0.0
        %517 = vmatpush1.msra.mxu0 0.0
        %518 = vmatprep.subr.mxu0 0.0
        %519 = vmatpush1.msra.mxu0 0.0
        %520 = vmatprep.subr.mxu0 0.0
        %521 = vmatpush1.msra.mxu0 0.0
        %522 = vmatprep.subr.mxu0 0.0
        %523 = vmatpush1.msra.mxu0 0.0
        %524 = vmatprep.subr.mxu0 0.0
        %525 = vmatpush1.msra.mxu0 0.0
        %526 = vmatprep.subr.mxu0 0.0
        %527 = vmatpush1.msra.mxu0 0.0
        %528 = vmatprep.subr.mxu0 0.0
        %529 = vmatpush1.msra.mxu0 0.0
        %530 = vmatprep.subr.mxu0 0.0
        %531 = vmatpush1.msra.mxu0 0.0
        %532 = vmatprep.subr.mxu0 0.0
        %533 = vmatpush1.msra.mxu0 0.0
        %534 = vmatprep.subr.mxu0 0.0
        %535 = vmatpush1.msra.mxu0 0.0
        %536 = vmatprep.subr.mxu0 0.0
        %537 = vmatpush1.msra.mxu0 0.0
        %538 = vmatprep.subr.mxu0 0.0
        %539 = vmatpush1.msra.mxu0 0.0
        %540 = vmatprep.subr.mxu0 0.0
        %541 = vmatpush1.msra.mxu0 0.0
        %542 = vmatprep.subr.mxu0 0.0
        %543 = vmatpush1.msra.mxu0 0.0
        %544 = vmatprep.subr.mxu0 0.0
        %545 = vmatpush1.msra.mxu0 0.0
        %546 = vmatprep.subr.mxu0 0.0
        %547 = vmatpush1.msra.mxu0 0.0
        %548 = vmatprep.subr.mxu0 0.0
        %549 = vmatpush1.msra.mxu0 0.0
        %550 = vmatprep.subr.mxu0 0.0
        %551 = vmatpush1.msra.mxu0 0.0
        %552 = vmatprep.mubr.f32.mxu0 0.0
        %553 = vmatmul.mubr.f32.gmra.mrb[0].mxu0 %v482
        %v554 = vpop.f32.mrb[0].mxu0
        %v555 = vadd.f32 %v478, %v554
        %v556 = vpop.f32.mrb[0].mxu0
        %557 = vdwg.mxu0
        %v558 = vmax.f32 %v555, 0.0
        %v559 = vld [vmem:[#allocation3] sm:$0xff]
        %v560 = vld [vmem:[#allocation3 + $0x8] sm:$0xff]
        %v561 = vld [vmem:[#allocation3 + $0x10] sm:$0xff]
        %v562 = vld [vmem:[#allocation3 + $0x18] sm:$0xff]
        %v563 = vld [vmem:[#allocation3 + $0x20] sm:$0xff]
        %v564 = vld [vmem:[#allocation3 + $0x28] sm:$0xff]
        %v565 = vld [vmem:[#allocation3 + $0x30] sm:$0xff]
        %v566 = vld [vmem:[#allocation3 + $0x38] sm:$0xff]
        %v567 = vld [vmem:[#allocation3 + $0x40] sm:$0xff]
        %v568 = vld [vmem:[#allocation3 + $0x48] sm:$0xff]
        %v569 = vld [vmem:[#allocation3 + $0x50] sm:$0xff]
        %v570 = vld [vmem:[#allocation3 + $0x58] sm:$0xff]
        %v571 = vld [vmem:[#allocation3 + $0x60] sm:$0xff]
        %v572 = vld [vmem:[#allocation3 + $0x68] sm:$0xff]
        %v573 = vld [vmem:[#allocation3 + $0x70] sm:$0xff]
        %v574 = vld [vmem:[#allocation3 + $0x78] sm:$0xff]
        %v575 = vld [vmem:[%s4] sm:$0x1]
        %v577 = vlaneseq
        %v578 = vshrl.u32 %v577, 7
        %v579 = vsub.s32 0, %v578
        %v580 = vrot.slane %v575, %v579
        %582 = vmatprep.subr.mxu0 0.0
        %583 = vmatpush1.msra.mxu0 %v559
        %584 = vmatprep.subr.mxu0 0.0
        %585 = vmatpush1.msra.mxu0 %v560
        %586 = vmatprep.subr.mxu0 0.0
        %587 = vmatpush1.msra.mxu0 %v561
        %588 = vmatprep.subr.mxu0 0.0
        %589 = vmatpush1.msra.mxu0 %v562
        %590 = vmatprep.subr.mxu0 0.0
        %591 = vmatpush1.msra.mxu0 %v563
        %592 = vmatprep.subr.mxu0 0.0
        %593 = vmatpush1.msra.mxu0 %v564
        %594 = vmatprep.subr.mxu0 0.0
        %595 = vmatpush1.msra.mxu0 %v565
        %596 = vmatprep.subr.mxu0 0.0
        %597 = vmatpush1.msra.mxu0 %v566
        %598 = vmatprep.subr.mxu0 0.0
        %599 = vmatpush1.msra.mxu0 %v567
        %600 = vmatprep.subr.mxu0 0.0
        %601 = vmatpush1.msra.mxu0 %v568
        %602 = vmatprep.subr.mxu0 0.0
        %603 = vmatpush1.msra.mxu0 %v569
        %604 = vmatprep.subr.mxu0 0.0
        %605 = vmatpush1.msra.mxu0 %v570
        %606 = vmatprep.subr.mxu0 0.0
        %607 = vmatpush1.msra.mxu0 %v571
        %608 = vmatprep.subr.mxu0 0.0
        %609 = vmatpush1.msra.mxu0 %v572
        %610 = vmatprep.subr.mxu0 0.0
        %611 = vmatpush1.msra.mxu0 %v573
        %612 = vmatprep.subr.mxu0 0.0
        %613 = vmatpush1.msra.mxu0 %v574
        %614 = vmatprep.subr.mxu0 0.0
        %615 = vmatpush1.msra.mxu0 0.0
        %616 = vmatprep.subr.mxu0 0.0
        %617 = vmatpush1.msra.mxu0 0.0
        %618 = vmatprep.subr.mxu0 0.0
        %619 = vmatpush1.msra.mxu0 0.0
        %620 = vmatprep.subr.mxu0 0.0
        %621 = vmatpush1.msra.mxu0 0.0
        %622 = vmatprep.subr.mxu0 0.0
        %623 = vmatpush1.msra.mxu0 0.0
        %624 = vmatprep.subr.mxu0 0.0
        %625 = vmatpush1.msra.mxu0 0.0
        %626 = vmatprep.subr.mxu0 0.0
        %627 = vmatpush1.msra.mxu0 0.0
        %628 = vmatprep.subr.mxu0 0.0
        %629 = vmatpush1.msra.mxu0 0.0
        %630 = vmatprep.subr.mxu0 0.0
        %631 = vmatpush1.msra.mxu0 0.0
        %632 = vmatprep.subr.mxu0 0.0
        %633 = vmatpush1.msra.mxu0 0.0
        %634 = vmatprep.subr.mxu0 0.0
        %635 = vmatpush1.msra.mxu0 0.0
        %636 = vmatprep.subr.mxu0 0.0
        %637 = vmatpush1.msra.mxu0 0.0
        %638 = vmatprep.subr.mxu0 0.0
        %639 = vmatpush1.msra.mxu0 0.0
        %640 = vmatprep.subr.mxu0 0.0
        %641 = vmatpush1.msra.mxu0 0.0
        %642 = vmatprep.subr.mxu0 0.0
        %643 = vmatpush1.msra.mxu0 0.0
        %644 = vmatprep.subr.mxu0 0.0
        %645 = vmatpush1.msra.mxu0 0.0
        %646 = vmatprep.mubr.f32.mxu0 0.0
        %647 = vmatmul.mubr.f32.gmra.mrb[0].mxu0 %v558
        %v648 = vpop.f32.mrb[0].mxu0
        %v649 = vadd.f32 %v580, %v648
        %v650 = vpop.f32.mrb[0].mxu0
        %651 = vdwg.mxu0
        %v652 = vmax.f32 %v649, 0.0
        %v653 = vld [vmem:[#allocation2] sm:$0x1]
        %v654 = vrot.slane %v652, 4
        %v655 = vadd.f32 %v652, %v654
        %v656 = vrot.slane %v655, 2
        %v657 = vadd.f32 %v655, %v656
        %v658 = vrot.slane %v657, 1
        %v659 = vadd.f32 %v657, %v658
        %v660 = vadd.f32 %v653, %v659
        %661 = vst [vmem:[#allocation2] sm:$0x1] %v660
        %p662 = scmp.eq.s32.totalorder %s33, 1
        // Predicated region
        $region85: #{tpu_custom_call.1} parent=63 // pred_check
          %p663 = pneg %p662
        $region86: #{tpu_custom_call.1} parent=63 // pred_check_branch
          %665 = sbr.rel (%p663) target = $region88
        $region87: #{tpu_custom_call.1} parent=63 // pred_region
          %v666 = vld [vmem:[#allocation2] sm:$0x1]
          %v667 = vmul.f32 %v666, 0.0625
          %v668 = vld [vmem:[#allocation6] sm:$0xff]
          %v669 = vld [vmem:[#allocation6 + $0x8] sm:$0xff]
          %v670 = vld [vmem:[#allocation6 + $0x10] sm:$0xff]
          %v671 = vld [vmem:[#allocation6 + $0x18] sm:$0xff]
          %v672 = vld [vmem:[#allocation6 + $0x20] sm:$0xff]
          %v673 = vld [vmem:[#allocation6 + $0x28] sm:$0xff]
          %v674 = vld [vmem:[#allocation6 + $0x30] sm:$0xff]
          %v675 = vld [vmem:[#allocation6 + $0x38] sm:$0xff]
          %v676 = vld [vmem:[#allocation6 + $0x40] sm:$0xff]
          %v677 = vld [vmem:[#allocation6 + $0x48] sm:$0xff]
          %v678 = vld [vmem:[#allocation6 + $0x50] sm:$0xff]
          %v679 = vld [vmem:[#allocation6 + $0x58] sm:$0xff]
          %v680 = vld [vmem:[#allocation6 + $0x60] sm:$0xff]
          %v681 = vld [vmem:[#allocation6 + $0x68] sm:$0xff]
          %v682 = vld [vmem:[#allocation6 + $0x70] sm:$0xff]
          %v683 = vld [vmem:[#allocation6 + $0x78] sm:$0xff]
          %v684 = vld [vmem:[%s6] sm:$0x1]
          %685 = vmatprep.subr.mxu0 0.0
          %686 = vmatpush1.msra.mxu0 %v668
          %687 = vmatprep.subr.mxu0 0.0
          %688 = vmatpush1.msra.mxu0 %v669
          %689 = vmatprep.subr.mxu0 0.0
          %690 = vmatpush1.msra.mxu0 %v670
          %691 = vmatprep.subr.mxu0 0.0
          %692 = vmatpush1.msra.mxu0 %v671
          %693 = vmatprep.subr.mxu0 0.0
          %694 = vmatpush1.msra.mxu0 %v672
          %695 = vmatprep.subr.mxu0 0.0
          %696 = vmatpush1.msra.mxu0 %v673
          %697 = vmatprep.subr.mxu0 0.0
          %698 = vmatpush1.msra.mxu0 %v674
          %699 = vmatprep.subr.mxu0 0.0
          %700 = vmatpush1.msra.mxu0 %v675
          %701 = vmatprep.subr.mxu0 0.0
          %702 = vmatpush1.msra.mxu0 %v676
          %703 = vmatprep.subr.mxu0 0.0
          %704 = vmatpush1.msra.mxu0 %v677
          %705 = vmatprep.subr.mxu0 0.0
          %706 = vmatpush1.msra.mxu0 %v678
          %707 = vmatprep.subr.mxu0 0.0
          %708 = vmatpush1.msra.mxu0 %v679
          %709 = vmatprep.subr.mxu0 0.0
          %710 = vmatpush1.msra.mxu0 %v680
          %711 = vmatprep.subr.mxu0 0.0
          %712 = vmatpush1.msra.mxu0 %v681
          %713 = vmatprep.subr.mxu0 0.0
          %714 = vmatpush1.msra.mxu0 %v682
          %715 = vmatprep.subr.mxu0 0.0
          %716 = vmatpush1.msra.mxu0 %v683
          %717 = vmatprep.subr.mxu0 0.0
          %718 = vmatpush1.msra.mxu0 0.0
          %719 = vmatprep.subr.mxu0 0.0
          %720 = vmatpush1.msra.mxu0 0.0
          %721 = vmatprep.subr.mxu0 0.0
          %722 = vmatpush1.msra.mxu0 0.0
          %723 = vmatprep.subr.mxu0 0.0
          %724 = vmatpush1.msra.mxu0 0.0
          %725 = vmatprep.subr.mxu0 0.0
          %726 = vmatpush1.msra.mxu0 0.0
          %727 = vmatprep.subr.mxu0 0.0
          %728 = vmatpush1.msra.mxu0 0.0
          %729 = vmatprep.subr.mxu0 0.0
          %730 = vmatpush1.msra.mxu0 0.0
          %731 = vmatprep.subr.mxu0 0.0
          %732 = vmatpush1.msra.mxu0 0.0
          %733 = vmatprep.subr.mxu0 0.0
          %734 = vmatpush1.msra.mxu0 0.0
          %735 = vmatprep.subr.mxu0 0.0
          %736 = vmatpush1.msra.mxu0 0.0
          %737 = vmatprep.subr.mxu0 0.0
          %738 = vmatpush1.msra.mxu0 0.0
          %739 = vmatprep.subr.mxu0 0.0
          %740 = vmatpush1.msra.mxu0 0.0
          %741 = vmatprep.subr.mxu0 0.0
          %742 = vmatpush1.msra.mxu0 0.0
          %743 = vmatprep.subr.mxu0 0.0
          %744 = vmatpush1.msra.mxu0 0.0
          %745 = vmatprep.subr.mxu0 0.0
          %746 = vmatpush1.msra.mxu0 0.0
          %747 = vmatprep.subr.mxu0 0.0
          %748 = vmatpush1.msra.mxu0 0.0
          %749 = vmatprep.mubr.f32.mxu0 0.0
          %750 = vmatmul.mubr.f32.gmra.mrb[0].mxu0 %v667
          %v751 = vpop.f32.mrb[0].mxu0
          %v752 = vadd.f32 %v684, %v751
          %v753 = vpop.f32.mrb[0].mxu0
          %754 = vdwg.mxu0
          %v755 = vmax.f32 %v752, 0.0
          %v756 = vld [vmem:[#allocation8] sm:$0xff]
          %v757 = vld [vmem:[#allocation8 + $0x8] sm:$0xff]
          %v758 = vld [vmem:[#allocation8 + $0x10] sm:$0xff]
          %v759 = vld [vmem:[#allocation8 + $0x18] sm:$0xff]
          %v760 = vld [vmem:[#allocation8 + $0x20] sm:$0xff]
          %v761 = vld [vmem:[#allocation8 + $0x28] sm:$0xff]
          %v762 = vld [vmem:[#allocation8 + $0x30] sm:$0xff]
          %v763 = vld [vmem:[#allocation8 + $0x38] sm:$0xff]
          %v764 = vld [vmem:[#allocation8 + $0x40] sm:$0xff]
          %v765 = vld [vmem:[#allocation8 + $0x48] sm:$0xff]
          %v766 = vld [vmem:[#allocation8 + $0x50] sm:$0xff]
          %v767 = vld [vmem:[#allocation8 + $0x58] sm:$0xff]
          %v768 = vld [vmem:[#allocation8 + $0x60] sm:$0xff]
          %v769 = vld [vmem:[#allocation8 + $0x68] sm:$0xff]
          %v770 = vld [vmem:[#allocation8 + $0x70] sm:$0xff]
          %v771 = vld [vmem:[#allocation8 + $0x78] sm:$0xff]
          %v772 = vld [vmem:[%s8] sm:$0x1]
          %773 = vmatprep.subr.mxu0 0.0
          %774 = vmatpush1.msra.mxu0 %v756
          %775 = vmatprep.subr.mxu0 0.0
          %776 = vmatpush1.msra.mxu0 %v757
          %777 = vmatprep.subr.mxu0 0.0
          %778 = vmatpush1.msra.mxu0 %v758
          %779 = vmatprep.subr.mxu0 0.0
          %780 = vmatpush1.msra.mxu0 %v759
          %781 = vmatprep.subr.mxu0 0.0
          %782 = vmatpush1.msra.mxu0 %v760
          %783 = vmatprep.subr.mxu0 0.0
          %784 = vmatpush1.msra.mxu0 %v761
          %785 = vmatprep.subr.mxu0 0.0
          %786 = vmatpush1.msra.mxu0 %v762
          %787 = vmatprep.subr.mxu0 0.0
          %788 = vmatpush1.msra.mxu0 %v763
          %789 = vmatprep.subr.mxu0 0.0
          %790 = vmatpush1.msra.mxu0 %v764
          %791 = vmatprep.subr.mxu0 0.0
          %792 = vmatpush1.msra.mxu0 %v765
          %793 = vmatprep.subr.mxu0 0.0
          %794 = vmatpush1.msra.mxu0 %v766
          %795 = vmatprep.subr.mxu0 0.0
          %796 = vmatpush1.msra.mxu0 %v767
          %797 = vmatprep.subr.mxu0 0.0
          %798 = vmatpush1.msra.mxu0 %v768
          %799 = vmatprep.subr.mxu0 0.0
          %800 = vmatpush1.msra.mxu0 %v769
          %801 = vmatprep.subr.mxu0 0.0
          %802 = vmatpush1.msra.mxu0 %v770
          %803 = vmatprep.subr.mxu0 0.0
          %804 = vmatpush1.msra.mxu0 %v771
          %805 = vmatprep.subr.mxu0 0.0
          %806 = vmatpush1.msra.mxu0 0.0
          %807 = vmatprep.subr.mxu0 0.0
          %808 = vmatpush1.msra.mxu0 0.0
          %809 = vmatprep.subr.mxu0 0.0
          %810 = vmatpush1.msra.mxu0 0.0
          %811 = vmatprep.subr.mxu0 0.0
          %812 = vmatpush1.msra.mxu0 0.0
          %813 = vmatprep.subr.mxu0 0.0
          %814 = vmatpush1.msra.mxu0 0.0
          %815 = vmatprep.subr.mxu0 0.0
          %816 = vmatpush1.msra.mxu0 0.0
          %817 = vmatprep.subr.mxu0 0.0
          %818 = vmatpush1.msra.mxu0 0.0
          %819 = vmatprep.subr.mxu0 0.0
          %820 = vmatpush1.msra.mxu0 0.0
          %821 = vmatprep.subr.mxu0 0.0
          %822 = vmatpush1.msra.mxu0 0.0
          %823 = vmatprep.subr.mxu0 0.0
          %824 = vmatpush1.msra.mxu0 0.0
          %825 = vmatprep.subr.mxu0 0.0
          %826 = vmatpush1.msra.mxu0 0.0
          %827 = vmatprep.subr.mxu0 0.0
          %828 = vmatpush1.msra.mxu0 0.0
          %829 = vmatprep.subr.mxu0 0.0
          %830 = vmatpush1.msra.mxu0 0.0
          %831 = vmatprep.subr.mxu0 0.0
          %832 = vmatpush1.msra.mxu0 0.0
          %833 = vmatprep.subr.mxu0 0.0
          %834 = vmatpush1.msra.mxu0 0.0
          %835 = vmatprep.subr.mxu0 0.0
          %836 = vmatpush1.msra.mxu0 0.0
          %837 = vmatprep.mubr.f32.mxu0 0.0
          %838 = vmatmul.mubr.f32.gmra.mrb[0].mxu0 %v755
          %v839 = vpop.f32.mrb[0].mxu0
          %v840 = vadd.f32 %v772, %v839
          %v841 = vpop.f32.mrb[0].mxu0
          %842 = vdwg.mxu0
          %v843 = vmax.f32 %v840, 0.0
          %v844 = vld [vmem:[#allocation9] sm:$0xff]
          %v845 = vld [vmem:[#allocation9 + $0x8] sm:$0xff]
          %v846 = vld [vmem:[#allocation9 + $0x10] sm:$0xff]
          %v847 = vld [vmem:[#allocation9 + $0x18] sm:$0xff]
          %v848 = vld [vmem:[#allocation9 + $0x20] sm:$0xff]
          %v849 = vld [vmem:[#allocation9 + $0x28] sm:$0xff]
          %v850 = vld [vmem:[#allocation9 + $0x30] sm:$0xff]
          %v851 = vld [vmem:[#allocation9 + $0x38] sm:$0xff]
          %v852 = vld [vmem:[#allocation9 + $0x40] sm:$0xff]
          %v853 = vld [vmem:[#allocation9 + $0x48] sm:$0xff]
          %v854 = vld [vmem:[#allocation9 + $0x50] sm:$0xff]
          %v855 = vld [vmem:[#allocation9 + $0x58] sm:$0xff]
          %v856 = vld [vmem:[#allocation9 + $0x60] sm:$0xff]
          %v857 = vld [vmem:[#allocation9 + $0x68] sm:$0xff]
          %v858 = vld [vmem:[#allocation9 + $0x70] sm:$0xff]
          %v859 = vld [vmem:[#allocation9 + $0x78] sm:$0xff]
          %v860 = vld [vmem:[%s10] sm:$0x1]
          %861 = vmatprep.subr.mxu0 0.0
          %862 = vmatpush1.msra.mxu0 %v844
          %863 = vmatprep.subr.mxu0 0.0
          %864 = vmatpush1.msra.mxu0 %v845
          %865 = vmatprep.subr.mxu0 0.0
          %866 = vmatpush1.msra.mxu0 %v846
          %867 = vmatprep.subr.mxu0 0.0
          %868 = vmatpush1.msra.mxu0 %v847
          %869 = vmatprep.subr.mxu0 0.0
          %870 = vmatpush1.msra.mxu0 %v848
          %871 = vmatprep.subr.mxu0 0.0
          %872 = vmatpush1.msra.mxu0 %v849
          %873 = vmatprep.subr.mxu0 0.0
          %874 = vmatpush1.msra.mxu0 %v850
          %875 = vmatprep.subr.mxu0 0.0
          %876 = vmatpush1.msra.mxu0 %v851
          %877 = vmatprep.subr.mxu0 0.0
          %878 = vmatpush1.msra.mxu0 %v852
          %879 = vmatprep.subr.mxu0 0.0
          %880 = vmatpush1.msra.mxu0 %v853
          %881 = vmatprep.subr.mxu0 0.0
          %882 = vmatpush1.msra.mxu0 %v854
          %883 = vmatprep.subr.mxu0 0.0
          %884 = vmatpush1.msra.mxu0 %v855
          %885 = vmatprep.subr.mxu0 0.0
          %886 = vmatpush1.msra.mxu0 %v856
          %887 = vmatprep.subr.mxu0 0.0
          %888 = vmatpush1.msra.mxu0 %v857
          %889 = vmatprep.subr.mxu0 0.0
          %890 = vmatpush1.msra.mxu0 %v858
          %891 = vmatprep.subr.mxu0 0.0
          %892 = vmatpush1.msra.mxu0 %v859
          %893 = vmatprep.subr.mxu0 0.0
          %894 = vmatpush1.msra.mxu0 0.0
          %895 = vmatprep.subr.mxu0 0.0
          %896 = vmatpush1.msra.mxu0 0.0
          %897 = vmatprep.subr.mxu0 0.0
          %898 = vmatpush1.msra.mxu0 0.0
          %899 = vmatprep.subr.mxu0 0.0
          %900 = vmatpush1.msra.mxu0 0.0
          %901 = vmatprep.subr.mxu0 0.0
          %902 = vmatpush1.msra.mxu0 0.0
          %903 = vmatprep.subr.mxu0 0.0
          %904 = vmatpush1.msra.mxu0 0.0
          %905 = vmatprep.subr.mxu0 0.0
          %906 = vmatpush1.msra.mxu0 0.0
          %907 = vmatprep.subr.mxu0 0.0
          %908 = vmatpush1.msra.mxu0 0.0
          %909 = vmatprep.subr.mxu0 0.0
          %910 = vmatpush1.msra.mxu0 0.0
          %911 = vmatprep.subr.mxu0 0.0
          %912 = vmatpush1.msra.mxu0 0.0
          %913 = vmatprep.subr.mxu0 0.0
          %914 = vmatpush1.msra.mxu0 0.0
          %915 = vmatprep.subr.mxu0 0.0
          %916 = vmatpush1.msra.mxu0 0.0
          %917 = vmatprep.subr.mxu0 0.0
          %918 = vmatpush1.msra.mxu0 0.0
          %919 = vmatprep.subr.mxu0 0.0
          %920 = vmatpush1.msra.mxu0 0.0
          %921 = vmatprep.subr.mxu0 0.0
          %922 = vmatpush1.msra.mxu0 0.0
          %923 = vmatprep.subr.mxu0 0.0
          %924 = vmatpush1.msra.mxu0 0.0
          %925 = vmatprep.mubr.f32.mxu0 0.0
          %926 = vmatmul.mubr.f32.gmra.mrb[0].mxu0 %v843
          %v927 = vpop.f32.mrb[0].mxu0
          %v928 = vadd.f32 %v860, %v927
          %v929 = vpop.f32.mrb[0].mxu0
          %930 = vdwg.mxu0
          %931 = vst [vmem:[%s457] sm:$0x1] %v928
        $region88: #{tpu_custom_call.1} parent=63 // pred_fallthru
          _
        %s932 = sand.u32 %s286, 1
        %s933 = scalar_lea.sflag [#allocation5], %s932
        %s934 = sand.u32 %s286, 1
        %s935 = scalar_lea.vmem [#allocation11], %s934
        // Predicated region
        $region89: #{tpu_custom_call.1} parent=63 // pred_check
          %p936 = pneg %p296
        $region90: #{tpu_custom_call.1} parent=63 // pred_check_branch
          %938 = sbr.rel (%p936) target = $region92
        $region91: #{tpu_custom_call.1} parent=63 // pred_region
          %s940 = ssub.s32 16, 16
          %941 = vsyncadd %s933, %s940
          %s942 = smul.addr %s32, 16
          %s943 = scalar_lea.hbm %s11, %s942
          %s945 = sshll.u32 %s935, 4
          %s946 = int_to_ptr.vmem [resolvable:$true] %s945
          %948 = dma.vmem_to_hbm [thread:$0]  %s946, 16, %s943, %s933
        $region92: #{tpu_custom_call.1} parent=63 // pred_fallthru
          _
      $region64: #{tpu_custom_call.1} parent=5 // pred_fallthru
        _
      %p949 = scmp.le.s32.totalorder 2, %s23
      // Predicated region
      $region93: #{tpu_custom_call.1} parent=5 // pred_check
        %p950 = pneg %p949
      $region94: #{tpu_custom_call.1} parent=5 // pred_check_branch
        %952 = sbr.rel (%p950) target = $region96
      $region95: #{tpu_custom_call.1} parent=5 // pred_region
        %s953 = ssub.s32 %s23, 2
        // Predicated region
        $region97: #{tpu_custom_call.1} parent=95 // pred_check
          %p954 = pneg %p302
        $region98: #{tpu_custom_call.1} parent=95 // pred_check_branch
          %956 = sbr.rel (%p954) target = $region100
        $region99: #{tpu_custom_call.1} parent=95 // pred_region
          %s957 = sand.u32 %s287, 1
          %s958 = scalar_lea.sflag [#allocation5], %s957
          %s959 = sand.u32 %s287, 1
          %s960 = scalar_lea.vmem [#allocation11], %s959
          %961 = dma.done %s958, 16
        $region100: #{tpu_custom_call.1} parent=95 // pred_fallthru
          _
      $region96: #{tpu_custom_call.1} parent=5 // pred_fallthru
        _
    $region6: #{tpu_custom_call.1} parent=1 // loop_footer
      %s27 = sadd.s32 1, %s23
    $region7: #{tpu_custom_call.1} parent=1 // loop_footer_branch
      %22 = sbr.rel target = $region3
    $region8: #{tpu_custom_call.1} parent=1 // loop_exit
      _
    %962 = vsyncpa [#allocation4], 1
    %s963 = scalar_lea.sflag [#allocation4], 1
    %964 = vsyncpa %s963, 1
    %965 = vsyncpa [#allocation7], 1
    %966 = vsyncpa [#allocation10], 1
    %967 = vsyncpa [#allocation5], 1
    %s968 = scalar_lea.sflag [#allocation5], 1
    %969 = vsyncpa %s968, 1

</llo_original>
